<compile_context>
chip_gen: v6e
topology: v6e:2x2x1
jax: 0.10.0
libtpu: 0.0.40
codegen_flags: <defaults>
</compile_context>

<pallas_src>
import functools

import jax
import jax.numpy as jnp
from jax import lax
from jax.experimental import pallas as pl
from jax.experimental.pallas import tpu as pltpu

LANE = 128             # vreg lane width
MAX_BLOCK_ROWS = 2048  # (2048,128) f32 = 1 MiB/block/input; 2 in x 2 buf + acc ~= 5 MiB VMEM
NUM_SHARDS = 2         # one partial sum per TensorCore on dual-TC chips (v7x)


def _round_up(n, m):
    return ((n + m - 1) // m) * m


def _sse_kernel(a_ref, b_ref, out_ref, acc_ref, *, block_rows, rows,
                steps_per_shard, needs_mask_from, padded_steps, scale):
    """Streaming scale * sum((a-b)^2), one partial sum per shard."""
    c = pl.program_id(0)          # shard ("parallel" axis; per-TC on megacore)
    s = pl.program_id(1)          # step within shard ("arbitrary" reduction axis)
    flat_blk = c * steps_per_shard + s

    @pl.when(s == 0)
    def _():
        acc_ref[...] = jnp.zeros_like(acc_ref)

    # Steady state: full blocks, no masking, pure VPU sub/mul/add.
    if needs_mask_from > 0:
        @pl.when(flat_blk < needs_mask_from)
        def _():
            d = a_ref[...].astype(jnp.float32) - b_ref[...].astype(jnp.float32)
            acc_ref[...] += d * d

    # Boundary path: the (at most one) partial last block plus any duplicated
    # out-of-range blocks introduced by rounding the step count up to the
    # shard count.  Row-only mask; runs on at most NUM_SHARDS grid steps and
    # is only emitted when statically required.
    if needs_mask_from < padded_steps:
        @pl.when(flat_blk >= needs_mask_from)
        def _():
            d = a_ref[...].astype(jnp.float32) - b_ref[...].astype(jnp.float32)
            row = lax.broadcasted_iota(jnp.int32, d.shape, 0)
            valid = (flat_blk * block_rows + row) < rows
            acc_ref[...] += jnp.where(valid, d * d, 0.0)

    @pl.when(s == pl.num_programs(1) - 1)
    def _():
        # Single cross-lane reduce per shard; final 0.5/n scale folded in here.
        out_ref[0] = jnp.sum(acc_ref[...], keepdims=True) * scale


def pallas_scaled_mse(a, b, extra_scale=1.0):
    """extra_scale * mean((a - b)**2); reduction done in a Pallas TPU kernel."""
    assert a.shape == b.shape, (a.shape, b.shape)
    assert a.dtype == b.dtype, (a.dtype, b.dtype)
    n = a.size
    itemsize = jnp.dtype(a.dtype).itemsize
    # dtype-native sublane tile: 8 rows for 4-byte, 16 for 2-byte, 32 for 1-byte
    sublane = {4: 8, 2: 16, 1: 32}.get(itemsize, 8)
    scale = float(extra_scale) / float(n)

    a_flat = jnp.ravel(a)
    b_flat = jnp.ravel(b)

    # Handle any <128-element tail in plain JAX instead of padding the whole
    # array (a concatenate would re-materialize both inputs in HBM).
    rem = n % LANE
    n_main = n - rem
    rows = n_main // LANE

    tail = None
    if rem:
        ta = a_flat[n_main:].astype(jnp.float32)
        tb = b_flat[n_main:].astype(jnp.float32)
        tail = jnp.sum((ta - tb) ** 2) * jnp.float32(scale)

    if rows == 0:
        return tail if tail is not None else jnp.float32(0.0)

    a2 = a_flat[:n_main].reshape(rows, LANE)
    b2 = b_flat[:n_main].reshape(rows, LANE)

    block_rows = min(MAX_BLOCK_ROWS, _round_up(rows, sublane))
    total_steps = pl.cdiv(rows, block_rows)
    num_shards = NUM_SHARDS if total_steps >= NUM_SHARDS else 1
    steps_per_shard = pl.cdiv(total_steps, num_shards)
    padded_steps = steps_per_shard * num_shards
    needs_mask_from = rows // block_rows  # first block index not completely full

    kernel = functools.partial(
        _sse_kernel, block_rows=block_rows, rows=rows,
        steps_per_shard=steps_per_shard, needs_mask_from=needs_mask_from,
        padded_steps=padded_steps, scale=scale)

    def in_map(c, s):
        # Clamp so duplicated trailing (shard, step) points never DMA past the
        # array; their contribution is masked to zero in-kernel.
        return (jnp.minimum(c * steps_per_shard + s, total_steps - 1), 0)

    partials = pl.pallas_call(
        kernel,
        out_shape=jax.ShapeDtypeStruct((num_shards, 1, 1), jnp.float32),
        grid_spec=pltpu.PrefetchScalarGridSpec(
            num_scalar_prefetch=0,
            grid=(num_shards, steps_per_shard),
            in_specs=[
                pl.BlockSpec((block_rows, LANE), in_map),
                pl.BlockSpec((block_rows, LANE), in_map),
            ],
            out_specs=pl.BlockSpec((1, 1, 1), lambda c, s: (c, 0, 0)),
            scratch_shapes=[pltpu.VMEM((block_rows, LANE), jnp.float32)],
        ),
        compiler_params=pltpu.CompilerParams(
            dimension_semantics=("parallel", "arbitrary")),
        cost_estimate=pl.CostEstimate(
            flops=3 * n,
            transcendentals=0,
            bytes_accessed=2 * n * itemsize + 4 * num_shards),
    )(a2, b2)

    result = jnp.sum(partials)
    if tail is not None:
        result = result + tail
    return result


def loss_forward(output, target, target_flows, number):
    """JAX/Pallas equivalent of Loss(number).forward(output, target, target_flows)."""
    # TODO(synk): PWCNet optical-flow network (external pretrained model, run
    # under torch.no_grad and detached) is not translated. Its MSE term is
    # multiplied by 0 in the original return value, so the whole flow loop is
    # dead work and is omitted here; the returned scalar is identical.
    del target_flows, number
    # 0.5 * MSE(output, target[0:1]); the 0.5/n scale is folded into the kernel.
    return pallas_scaled_mse(output, target[0][None, ...], extra_scale=0.5)


if __name__ == "__main__":
    key = jax.random.PRNGKey(0)
    k1, k2, k3 = jax.random.split(key, 3)

    number = 3          # Loss(number)
    C, H, W = 3, 16, 16

    output = jax.random.normal(k1, (1, C, H, W), dtype=jnp.float32)
    target = jax.random.normal(k2, (number, C, H, W), dtype=jnp.float32)
    # PWCNet-style flows: batch=1, 2 channels (u, v)
    target_flows = jax.random.normal(k3, (number - 1, 1, 2, H, W), dtype=jnp.float32)

    loss = loss_forward(output, target, target_flows, number)
    loss = jax.block_until_ready(loss)

    # Reference: flow term has coefficient 0, so loss == 0.5 * mean((output - target[0])^2)
    ref = 0.5 * jnp.mean((output - target[0][None, ...]) ** 2)
    assert jnp.allclose(loss, ref, rtol=1e-5, atol=1e-6), (loss, ref)

    print("KERNEL_OK")
</pallas_src>

<mosaic_0001>
module attributes {stable_mosaic.version = 11 : i64} {
  func.func @_sse_kernel(%arg0: i32, %arg1: i32, %arg2: memref<8x128xf32, #tpu.memory_space<vmem>>, %arg3: memref<8x128xf32, #tpu.memory_space<vmem>>, %arg4: memref<1x1x1xf32, #tpu.memory_space<vmem>>, %arg5: memref<8x128xf32, #tpu.memory_space<vmem>>) attributes {dimension_semantics = [#tpu.dimension_semantics<parallel>, #tpu.dimension_semantics<arbitrary>], iteration_bounds = array<i64: 1, 1>, scalar_prefetch = 0 : i64, scratch_operands = 1 : i64, tpu.core_type = #tpu.core_type<tc>, window_params = [{transform_indices = @transform_0, window_bounds = array<i64: 8, 128>}, {transform_indices = @transform_1, window_bounds = array<i64: 8, 128>}, {transform_indices = @transform_2, window_bounds = array<i64: 1, 1, 1>}]} {
    %c1_i32 = arith.constant 1 : i32
    %0 = arith.muli %arg0, %c1_i32 : i32
    %1 = arith.addi %0, %arg1 : i32
    %c0_i32 = arith.constant 0 : i32
    %2 = arith.cmpi eq, %arg1, %c0_i32 : i32
    %3 = arith.extui %2 : i1 to i32
    %c0_i32_0 = arith.constant 0 : i32
    %4 = arith.cmpi ne, %3, %c0_i32_0 : i32
    scf.if %4 {
      %cst = arith.constant 0.000000e+00 : f32
      %11 = vector.broadcast %cst : f32 to vector<8x128xf32>
      %c0 = arith.constant 0 : index
      %c0_5 = arith.constant 0 : index
      %12 = vector.load %arg5[%c0, %c0_5] : memref<8x128xf32, #tpu.memory_space<vmem>>, vector<8x128xf32>
      tpu.vector_store %arg5[%c0, %c0_5], %11 {strides = array<i32>} : memref<8x128xf32, #tpu.memory_space<vmem>>, vector<8x128xf32>,
    } else {
    }
    %c0_i32_1 = arith.constant 0 : i32
    %5 = arith.cmpi sge, %1, %c0_i32_1 : i32
    %6 = arith.extui %5 : i1 to i32
    %c0_i32_2 = arith.constant 0 : i32
    %7 = arith.cmpi ne, %6, %c0_i32_2 : i32
    scf.if %7 {
      %c0 = arith.constant 0 : index
      %c0_5 = arith.constant 0 : index
      %11 = vector.load %arg2[%c0, %c0_5] : memref<8x128xf32, #tpu.memory_space<vmem>>, vector<8x128xf32>
      %c0_6 = arith.constant 0 : index
      %c0_7 = arith.constant 0 : index
      %12 = vector.load %arg3[%c0_6, %c0_7] : memref<8x128xf32, #tpu.memory_space<vmem>>, vector<8x128xf32>
      %13 = arith.subf %11, %12 : vector<8x128xf32>
      %14 = tpu.iota {dimensions = array<i32: 0>} : vector<8x128xi32>
      %c8_i32 = arith.constant 8 : i32
      %15 = arith.muli %1, %c8_i32 : i32
      %16 = vector.broadcast %15 : i32 to vector<8x128xi32>
      %17 = arith.addi %16, %14 : vector<8x128xi32>
      %c6_i32 = arith.constant 6 : i32
      %18 = vector.broadcast %c6_i32 : i32 to vector<8x128xi32>
      %19 = arith.cmpi slt, %17, %18 : vector<8x128xi32>
      %c0_8 = arith.constant 0 : index
      %c0_9 = arith.constant 0 : index
      %20 = vector.load %arg5[%c0_8, %c0_9] : memref<8x128xf32, #tpu.memory_space<vmem>>, vector<8x128xf32>
      %21 = arith.mulf %13, %13 : vector<8x128xf32>
      %cst = arith.constant 0.000000e+00 : f32
      %22 = vector.broadcast %cst : f32 to vector<8x128xf32>
      %23 = arith.select %19, %21, %22 : vector<8x128xi1>, vector<8x128xf32>
      %24 = arith.addf %20, %23 : vector<8x128xf32>
      %c0_10 = arith.constant 0 : index
      %c0_11 = arith.constant 0 : index
      %25 = vector.load %arg5[%c0_10, %c0_11] : memref<8x128xf32, #tpu.memory_space<vmem>>, vector<8x128xf32>
      tpu.vector_store %arg5[%c0_10, %c0_11], %24 {strides = array<i32>} : memref<8x128xf32, #tpu.memory_space<vmem>>, vector<8x128xf32>,
    } else {
    }
    %c0_i32_3 = arith.constant 0 : i32
    %8 = arith.cmpi eq, %arg1, %c0_i32_3 : i32
    %9 = arith.extui %8 : i1 to i32
    %c0_i32_4 = arith.constant 0 : i32
    %10 = arith.cmpi ne, %9, %c0_i32_4 : i32
    scf.if %10 {
      %c0 = arith.constant 0 : index
      %c0_5 = arith.constant 0 : index
      %11 = vector.load %arg5[%c0, %c0_5] : memref<8x128xf32, #tpu.memory_space<vmem>>, vector<8x128xf32>
      %12 = vector.shape_cast %11 : vector<8x128xf32> to vector<1x8x128xf32>
      %cst = arith.constant dense<0.000000e+00> : vector<1xf32>
      %13 = vector.multi_reduction <add>, %12, %cst [1, 2] : vector<1x8x128xf32> to vector<1xf32>
      %14 = vector.shape_cast %13 : vector<1xf32> to vector<1x1x1xf32>
      %15 = vector.extract %14[0, 0, 0] : f32 from vector<1x1x1xf32>
      %16 = vector.broadcast %15 : f32 to vector<1x1xf32>
      %cst_6 = arith.constant 6.51041686E-4 : f32
      %17 = vector.broadcast %cst_6 : f32 to vector<1x1xf32>
      %18 = arith.mulf %16, %17 : vector<1x1xf32>
      %c0_7 = arith.constant 0 : index
      %c0_8 = arith.constant 0 : index
      %c0_9 = arith.constant 0 : index
      %19 = vector.load %arg4[%c0_7, %c0_8, %c0_9] : memref<1x1x1xf32, #tpu.memory_space<vmem>>, vector<1x1x1xf32>
      %20 = vector.shape_cast %19 : vector<1x1x1xf32> to vector<1x1xf32>
      %21 = vector.shape_cast %18 : vector<1x1xf32> to vector<1x1x1xf32>
      tpu.vector_store %arg4[%c0_7, %c0_8, %c0_9], %21 {strides = array<i32>} : memref<1x1x1xf32, #tpu.memory_space<vmem>>, vector<1x1x1xf32>,
    } else {
    }
    return
  }
  func.func @transform_0(%arg0: i32, %arg1: i32) -> (i32, i32) {
    %c1_i32 = arith.constant 1 : i32
    %0 = arith.muli %arg0, %c1_i32 : i32
    %1 = arith.addi %0, %arg1 : i32
    %c0_i32 = arith.constant 0 : i32
    %2 = arith.minsi %1, %c0_i32 : i32
    %c0_i32_0 = arith.constant 0 : i32
    %c0_i32_1 = arith.constant 0 : i32
    return %2, %c0_i32_0 : i32, i32
  }
  func.func @transform_1(%arg0: i32, %arg1: i32) -> (i32, i32) {
    %c1_i32 = arith.constant 1 : i32
    %0 = arith.muli %arg0, %c1_i32 : i32
    %1 = arith.addi %0, %arg1 : i32
    %c0_i32 = arith.constant 0 : i32
    %2 = arith.minsi %1, %c0_i32 : i32
    %c0_i32_0 = arith.constant 0 : i32
    %c0_i32_1 = arith.constant 0 : i32
    return %2, %c0_i32_0 : i32, i32
  }
  func.func @transform_2(%arg0: i32, %arg1: i32) -> (i32, i32, i32) {
    %c0_i32 = arith.constant 0 : i32
    %c0_i32_0 = arith.constant 0 : i32
    %c0_i32_1 = arith.constant 0 : i32
    return %arg0, %c0_i32, %c0_i32_0 : i32, i32, i32
  }
}

</mosaic_0001>

<llo_original>
// kernel: tpu_custom_call.1
$region0: #{tpu_custom_call.1}
  #allocation0 [shape = 'u32[]', space=smem, size = 0x4, offset = 0x4, fixed_abs, tag = 'smem constant byte address 0x4 - core index']
  #allocation1 [shape = 'u32[144,128]{1,0:T(1,128)}', space=vmem, size = 0x12000, scoped, tag = 'internal scratch']
  #allocation2 [shape = 'f32[8,128]{1,0:T(8,128)}', space=vmem, size = 0x1000, scoped, tag = 'scratch operand']
  %s0 = inlined_call_operand.hbm [shape: f32[6,128], index: 0, kind: input, shape index: {}]
  %s1 = inlined_call_operand.hbm [shape: f32[6,128], index: 1, kind: input, shape index: {}]
  %s2 = inlined_call_operand.hbm [shape: f32[1,1,1], index: 2, kind: output, shape index: {}]
  %s3 = sld [smem:[#allocation0]]
  $region38: #{tpu_custom_call.1} parent=0
    _
  %s5 = ssub.s32 1, %s3
  %s6 = scalar_select 0, %s5, %s3
  $region1: #{tpu_custom_call.1} parent=0
    #allocation3 [shape = 'u8[4096]{0}', space=vmem, size = 0x1000, scoped, tag = 'input window, operand 0, single buffered']
    #allocation4 [shape = 's32[1]{0}', space=sflag, size = 0x4, scoped, tag = 'scoped memory for tpu_custom_call.1']
    #allocation5 [shape = 's32[1]{0}', space=sflag, size = 0x4, scoped, tag = 'scoped memory for tpu_custom_call.1']
    #allocation6 [shape = 'u8[4096]{0}', space=vmem, size = 0x1000, scoped, tag = 'input window, operand 1, single buffered']
    #allocation7 [shape = 's32[1]{0}', space=sflag, size = 0x4, scoped, tag = 'scoped memory for tpu_custom_call.1']
    #allocation8 [shape = 'u8[512]{0}', space=vmem, size = 0x400, scoped, tag = 'output window, operand 0, single buffered']
    %7 = vsyncpa [#allocation4], 0
    %8 = vsyncpa [#allocation7], 0
    %9 = vsyncpa [#allocation5], 0
    // Predicated region
    $region2: #{tpu_custom_call.1} parent=1 // pred_check
      _
    $region3: #{tpu_custom_call.1} parent=1 // pred_check_branch
      %11 = sbr.rel (0) target = $region5
    $region4: #{tpu_custom_call.1} parent=1 // pred_region
      %s12 = sadd.s32 0, 0
      %p13 = scmp.lt.s32.totalorder %s12, 0
      %s14 = scalar_select %p13, %s12, 0
      %s16 = ssub.s32 128, 128
      %17 = vsyncadd [#allocation4], %s16
      %s18 = smul.addr %s14, 128
      %s19 = scalar_lea.hbm %s0, %s18
      %s21 = sshll.u32 [#allocation3], 4
      %s22 = int_to_ptr.vmem [resolvable:$true] %s21
      %24 = dma.hbm_to_vmem [thread:$0]  %s19, 128, %s22, [#allocation4]
    $region5: #{tpu_custom_call.1} parent=1 // pred_fallthru
      _
    // Predicated region
    $region6: #{tpu_custom_call.1} parent=1 // pred_check
      _
    $region7: #{tpu_custom_call.1} parent=1 // pred_check_branch
      %26 = sbr.rel (0) target = $region9
    $region8: #{tpu_custom_call.1} parent=1 // pred_region
      %s27 = sadd.s32 0, 0
      %p28 = scmp.lt.s32.totalorder %s27, 0
      %s29 = scalar_select %p28, %s27, 0
      %s31 = ssub.s32 128, 128
      %32 = vsyncadd [#allocation7], %s31
      %s33 = smul.addr %s29, 128
      %s34 = scalar_lea.hbm %s1, %s33
      %s36 = sshll.u32 [#allocation6], 4
      %s37 = int_to_ptr.vmem [resolvable:$true] %s36
      %39 = dma.hbm_to_vmem [thread:$0]  %s34, 128, %s37, [#allocation7]
    $region9: #{tpu_custom_call.1} parent=1 // pred_fallthru
      _
    // Predicated region
    $region10: #{tpu_custom_call.1} parent=1 // pred_check
      _
    $region11: #{tpu_custom_call.1} parent=1 // pred_check_branch
      %41 = sbr.rel (0) target = $region13
    $region12: #{tpu_custom_call.1} parent=1 // pred_region
      %42 = dma.done [#allocation4], 128
    $region13: #{tpu_custom_call.1} parent=1 // pred_fallthru
      _
    // Predicated region
    $region14: #{tpu_custom_call.1} parent=1 // pred_check
      _
    $region15: #{tpu_custom_call.1} parent=1 // pred_check_branch
      %44 = sbr.rel (0) target = $region17
    $region16: #{tpu_custom_call.1} parent=1 // pred_region
      %45 = dma.done [#allocation7], 128
    $region17: #{tpu_custom_call.1} parent=1 // pred_fallthru
      _
    %s46 = sadd.s32 0, 0
    %p47 = scmp.lt.s32.totalorder %s46, 0
    %s48 = scalar_select %p47, %s46, 0
    %s49 = sadd.s32 0, 0
    %p50 = scmp.lt.s32.totalorder %s49, 0
    %s51 = scalar_select %p50, %s49, 0
    %s52 = sadd.s32 0, 0
    %p53 = scmp.eq.s32.totalorder 0, 0
    // Predicated region
    $region18: #{tpu_custom_call.1} parent=1 // pred_check
      %p54 = pneg %p53
    $region19: #{tpu_custom_call.1} parent=1 // pred_check_branch
      %56 = sbr.rel (%p54) target = $region21
    $region20: #{tpu_custom_call.1} parent=1 // pred_region
      %57 = vst [vmem:[#allocation2] sm:$0xff] 0.0
    $region21: #{tpu_custom_call.1} parent=1 // pred_fallthru
      _
    %p58 = scmp.ge.s32.totalorder %s52, 0
    // Predicated region
    $region22: #{tpu_custom_call.1} parent=1 // pred_check
      %p59 = pneg %p58
    $region23: #{tpu_custom_call.1} parent=1 // pred_check_branch
      %61 = sbr.rel (%p59) target = $region25
    $region24: #{tpu_custom_call.1} parent=1 // pred_region
      %v62 = vld [vmem:[#allocation3] sm:$0xff]
      %v63 = vld [vmem:[#allocation6] sm:$0xff]
      %v64 = vsub.f32 %v62, %v63
      %v65 = vlaneseq
      %v66 = vshrl.u32 %v65, 7
      %s67 = smul.u32 %s52, 8
      %v68 = vstv %s67
      %v69 = vadd.s32 %v68, %v66
      %vm70 = vcmp.lt.s32.totalorder %v69, 6
      %v71 = vld [vmem:[#allocation2] sm:$0xff]
      %v72 = vmul.f32 %v64, %v64
      %v73 = vsel %vm70, %v72, 0.0
      %v74 = vadd.f32 %v71, %v73
      %75 = vst [vmem:[#allocation2] sm:$0xff] %v74
    $region25: #{tpu_custom_call.1} parent=1 // pred_fallthru
      _
    // Predicated region
    $region26: #{tpu_custom_call.1} parent=1 // pred_check
      %p76 = pneg %p53
    $region27: #{tpu_custom_call.1} parent=1 // pred_check_branch
      %78 = sbr.rel (%p76) target = $region29
    $region28: #{tpu_custom_call.1} parent=1 // pred_region
      %v79 = vld [vmem:[#allocation2] sm:$0xff]
      %80 = vadd.xlane.f32.xlu0 %v79
      %v81 = vpop.xlane.xlu0 %80
      %v82 = vrot.slane %v81, 4
      %v83 = vadd.f32 %v81, %v82
      %v84 = vrot.slane %v83, 2
      %v85 = vadd.f32 %v83, %v84
      %v86 = vrot.slane %v85, 1
      %v87 = vadd.f32 %v85, %v86
      %s88 = vtos %v87
      %v89 = vstv %s88
      %v90 = vmul.f32 %v89, 0.0006510417
      %vm91 = vcmask 0
      %92 = vst.msk [vmem:[#allocation8] sm:$0x1] %vm91, %v90
    $region29: #{tpu_custom_call.1} parent=1 // pred_fallthru
      _
    // Predicated region
    $region30: #{tpu_custom_call.1} parent=1 // pred_check
      _
    $region31: #{tpu_custom_call.1} parent=1 // pred_check_branch
      %94 = sbr.rel (0) target = $region33
    $region32: #{tpu_custom_call.1} parent=1 // pred_region
      %s96 = ssub.s32 16, 16
      %97 = vsyncadd [#allocation5], %s96
      %s99 = sshll.u32 [#allocation8], 4
      %s100 = int_to_ptr.vmem [resolvable:$true] %s99
      %102 = dma.vmem_to_hbm [thread:$0]  %s100, 16, %s2, [#allocation5]
    $region33: #{tpu_custom_call.1} parent=1 // pred_fallthru
      _
    // Predicated region
    $region34: #{tpu_custom_call.1} parent=1 // pred_check
      _
    $region35: #{tpu_custom_call.1} parent=1 // pred_check_branch
      %104 = sbr.rel (0) target = $region37
    $region36: #{tpu_custom_call.1} parent=1 // pred_region
      %105 = dma.done [#allocation5], 16
    $region37: #{tpu_custom_call.1} parent=1 // pred_fallthru
      _
    %106 = vsyncpa [#allocation4], 1
    %107 = vsyncpa [#allocation7], 1
    %108 = vsyncpa [#allocation5], 1

</llo_original>
